<compile_context>
chip_gen: v5e
topology: v5e:2x2
jax: 0.10.0
libtpu: 0.0.40
codegen_flags: <defaults>
</compile_context>

<pallas_src>
import functools

import jax
import jax.numpy as jnp
from jax.experimental import pallas as pl
from jax.experimental.pallas import tpu as pltpu

LANE = 128   # vreg lane width
SUB = 8      # vreg sublane count


# ------------------------------ helpers ----------------------------------- #
def _round_up(x, m):
    return ((x + m - 1) // m) * m


def _pad2d(a, rows, cols):
    r, c = a.shape
    return jnp.pad(a, ((0, rows - r), (0, cols - c)))


def _pick_tile(dim, pref):
    """Largest tile <= pref that divides dim (dim is a multiple of 128)."""
    t = min(pref, dim)
    while t > 1 and dim % t != 0:
        t //= 2
    return max(t, 1)


# -------------------------- fused GCN layer kernel ------------------------- #
def _gcn_layer_kernel(a_ref, h_ref, w_ref, b_ref, o_ref, acc_ref):
    """One (tm, H) output tile of  A @ (h @ W) + b  (fused GCN layer).

    Grid = (rows/tm, rows/tk); the graph-dimension reduction is the innermost
    grid axis.  W and b are grid-index independent (VMEM-resident for the
    whole call); h is streamed (tk, H) alongside its matching A tile and h@W
    is recomputed per row tile — trading MXU slack for one fewer HBM round
    trip of the (N, H) intermediate (the layer is HBM-bound on all gens).
    """
    k = pl.program_id(1)

    @pl.when(k == 0)
    def _init():
        acc_ref[...] = jnp.zeros_like(acc_ref)

    hw = jnp.dot(h_ref[...], w_ref[...],
                 preferred_element_type=jnp.float32).astype(jnp.bfloat16)
    acc_ref[...] += jnp.dot(a_ref[...], hw,
                            preferred_element_type=jnp.float32)

    @pl.when(k == pl.num_programs(1) - 1)
    def _finalize():
        # bias fused into the epilogue; bf16 output for intermediates
        o_ref[...] = (acc_ref[...] + b_ref[...]).astype(o_ref.dtype)


def gcn_layer(a, h, w, b, *, tm=512, tk=512, out_dtype=jnp.bfloat16):
    """out = A @ (h @ W) + b as one fused, tiled Pallas call (bf16 in, f32 acc)."""
    M, K = a.shape
    K2, Hin = h.shape
    Hin2, Hout = w.shape
    assert K == K2 and Hin == Hin2, (a.shape, h.shape, w.shape)

    tm = _pick_tile(M, tm)
    tk = _pick_tile(K, tk)
    grid = (M // tm, K // tk)

    return pl.pallas_call(
        _gcn_layer_kernel,
        out_shape=jax.ShapeDtypeStruct((M, Hout), out_dtype),
        grid_spec=pltpu.PrefetchScalarGridSpec(
            num_scalar_prefetch=0,
            grid=grid,
            in_specs=[
                pl.BlockSpec((tm, tk), lambda i, k: (i, k)),     # A tile
                pl.BlockSpec((tk, Hin), lambda i, k: (k, 0)),    # h tile
                pl.BlockSpec((Hin, Hout), lambda i, k: (0, 0)),  # W (resident)
                pl.BlockSpec((1, Hout), lambda i, k: (0, 0)),    # bias (resident)
            ],
            out_specs=pl.BlockSpec((tm, Hout), lambda i, k: (i, 0)),
            scratch_shapes=[pltpu.VMEM((tm, Hout), jnp.float32)],
        ),
        compiler_params=pltpu.CompilerParams(
            # row tiles independent -> megacore-shardable; reduction axis
            # (k) last and "arbitrary" for the resident accumulator.
            dimension_semantics=("parallel", "arbitrary"),
        ),
    )(a, h, w, b)


# ---------------- fused conv3 + mean-pool + linear kernel ------------------ #
def _gcn_final_kernel(a_ref, h_ref, w_ref, b_ref, p_ref, wl_ref, bl_ref,
                      o_ref, acc_ref, pool_ref):
    """conv3 + global_mean_pool + dropout(eval) + Linear in one call.

    Per row tile i:  h3_i = A[i,:] @ (h @ W3) + b3  (accumulated over k),
    then pooled += P[:, i] @ h3_i (h3 never leaves VMEM).  At the final grid
    step the tiny (G, C) logits  pooled @ Wl + bl  are written; the output
    BlockSpec index map is constant so that block stays VMEM-resident.
    """
    i = pl.program_id(0)
    k = pl.program_id(1)
    last_i = pl.num_programs(0) - 1
    last_k = pl.num_programs(1) - 1

    @pl.when(jnp.logical_and(i == 0, k == 0))
    def _init_pool():
        pool_ref[...] = jnp.zeros_like(pool_ref)

    @pl.when(k == 0)
    def _init_acc():
        acc_ref[...] = jnp.zeros_like(acc_ref)

    hw = jnp.dot(h_ref[...], w_ref[...],
                 preferred_element_type=jnp.float32).astype(jnp.bfloat16)
    acc_ref[...] += jnp.dot(a_ref[...], hw,
                            preferred_element_type=jnp.float32)

    @pl.when(k == last_k)
    def _pool_row_tile():
        h3 = (acc_ref[...] + b_ref[...]).astype(jnp.bfloat16)
        pool_ref[...] += jnp.dot(p_ref[...], h3,
                                 preferred_element_type=jnp.float32)

    @pl.when(jnp.logical_and(i == last_i, k == last_k))
    def _finalize():
        # dropout(p=0.5, training=False) is the identity in eval mode.
        logits = jnp.dot(pool_ref[...].astype(jnp.bfloat16), wl_ref[...],
                         preferred_element_type=jnp.float32) + bl_ref[...]
        o_ref[...] = logits.astype(o_ref.dtype)


def gcn_final(a, h, w3, b3, pool, wl, bl, *, tm=512, tk=512):
    """logits = (P @ (A @ (h @ W3) + b3)) @ Wl + bl, one fused Pallas call."""
    M, K = a.shape
    _, H = h.shape
    G = pool.shape[0]
    C = wl.shape[1]

    tm = _pick_tile(M, tm)
    tk = _pick_tile(K, tk)
    grid = (M // tm, K // tk)

    return pl.pallas_call(
        _gcn_final_kernel,
        out_shape=jax.ShapeDtypeStruct((G, C), jnp.float32),
        grid_spec=pltpu.PrefetchScalarGridSpec(
            num_scalar_prefetch=0,
            grid=grid,
            in_specs=[
                pl.BlockSpec((tm, tk), lambda i, k: (i, k)),  # A tile
                pl.BlockSpec((tk, H), lambda i, k: (k, 0)),   # h tile
                pl.BlockSpec((H, H), lambda i, k: (0, 0)),    # W3 (resident)
                pl.BlockSpec((1, H), lambda i, k: (0, 0)),    # b3 (resident)
                pl.BlockSpec((G, tm), lambda i, k: (0, i)),   # pool row-slice
                pl.BlockSpec((H, C), lambda i, k: (0, 0)),    # Wl (resident)
                pl.BlockSpec((1, C), lambda i, k: (0, 0)),    # bl (resident)
            ],
            out_specs=pl.BlockSpec((G, C), lambda i, k: (0, 0)),
            scratch_shapes=[pltpu.VMEM((tm, H), jnp.float32),   # row-tile acc
                            pltpu.VMEM((G, H), jnp.float32)],   # pooled acc
        ),
        compiler_params=pltpu.CompilerParams(
            # pooled accumulates across i too, so both axes are "arbitrary".
            dimension_semantics=("arbitrary", "arbitrary"),
        ),
    )(a, h, w3, b3, pool, wl, bl)


# ------------------------------ JAX glue ---------------------------------- #
@jax.jit
def gcn_forward(a_hat, pool, x, params):
    """Full GCN forward; everything fused under a single jit."""
    (w1, b1, w2, b2, w3, b3, wl, bl) = params
    N, D = x.shape
    G = pool.shape[0]
    H = w1.shape[1]
    C = wl.shape[1]

    Np = _round_up(N, LANE)
    Dp = _round_up(D, LANE)
    Hp = _round_up(H, LANE)
    Gp = _round_up(G, SUB)
    Cp = _round_up(C, LANE)

    # Pad once and cast matmul operands to bf16 once (hoisted out of the
    # per-layer calls).  Zero padding is mathematically inert: padded A
    # rows/cols, pool columns and weight rows/cols are zero; the bias that
    # leaks onto padded node rows is killed by the zero pool columns.
    a_p = _pad2d(a_hat, Np, Np).astype(jnp.bfloat16)
    p_p = _pad2d(pool, Gp, Np).astype(jnp.bfloat16)
    x_p = _pad2d(x, Np, Dp).astype(jnp.bfloat16)
    w1_p = _pad2d(w1, Dp, Hp).astype(jnp.bfloat16)
    w2_p = _pad2d(w2, Hp, Hp).astype(jnp.bfloat16)
    w3_p = _pad2d(w3, Hp, Hp).astype(jnp.bfloat16)
    wl_p = _pad2d(wl, Hp, Cp).astype(jnp.bfloat16)
    b1_p = _pad2d(b1.reshape(1, -1), 1, Hp).astype(jnp.float32)
    b2_p = _pad2d(b2.reshape(1, -1), 1, Hp).astype(jnp.float32)
    b3_p = _pad2d(b3.reshape(1, -1), 1, Hp).astype(jnp.float32)
    bl_p = _pad2d(bl.reshape(1, -1), 1, Cp).astype(jnp.float32)

    # conv1, conv2: fused A @ (h @ W) + b, bf16 intermediates / f32 accumulate.
    h = gcn_layer(a_p, x_p, w1_p, b1_p)
    h = gcn_layer(a_p, h, w2_p, b2_p)
    # conv3 + global_mean_pool + dropout(eval) + Linear, fused in one call.
    out = gcn_final(a_p, h, w3_p, b3_p, p_p, wl_p, bl_p)
    return out[:G, :C]


def gcn_reference(a_hat, pool, x, params):
    """Pure-JAX f32 reference (same math, unpadded) for correctness checking."""
    (w1, b1, w2, b2, w3, b3, wl, bl) = params
    h = a_hat @ (x @ w1) + b1
    h = a_hat @ (h @ w2) + b2
    h = a_hat @ (h @ w3) + b3
    pooled = pool @ h
    return pooled @ wl + bl


def build_norm_adj(edge_index, num_nodes):
    """Dense D^{-1/2}(A + I)D^{-1/2}, messages flow src -> dst (PyG convention)."""
    src = edge_index[0]
    dst = edge_index[1]
    self_idx = jnp.arange(num_nodes, dtype=src.dtype)
    src = jnp.concatenate([src, self_idx])
    dst = jnp.concatenate([dst, self_idx])
    deg = jnp.zeros((num_nodes,), jnp.float32).at[dst].add(1.0)
    dinv = jnp.where(deg > 0, 1.0 / jnp.sqrt(deg), 0.0)
    norm = dinv[src] * dinv[dst]
    a = jnp.zeros((num_nodes, num_nodes), jnp.float32).at[dst, src].add(norm)
    return a


def build_pool_matrix(batch, num_graphs):
    onehot = (batch[None, :] == jnp.arange(num_graphs)[:, None]).astype(jnp.float32)
    counts = jnp.maximum(onehot.sum(axis=1, keepdims=True), 1.0)
    return onehot / counts                      # (G, N)


def init_params(key, num_features, hidden, num_classes):
    ks = jax.random.split(key, 8)

    def lin(k, fan_in, fan_out):
        # deterministic synthetic init (not a checkpoint load)
        return jax.random.normal(k, (fan_in, fan_out), jnp.float32) * (1.0 / jnp.sqrt(fan_in))

    w1 = lin(ks[0], num_features, hidden)
    b1 = jax.random.normal(ks[1], (1, hidden), jnp.float32) * 0.01
    w2 = lin(ks[2], hidden, hidden)
    b2 = jax.random.normal(ks[3], (1, hidden), jnp.float32) * 0.01
    w3 = lin(ks[4], hidden, hidden)
    b3 = jax.random.normal(ks[5], (1, hidden), jnp.float32) * 0.01
    wl = lin(ks[6], hidden, num_classes)
    bl = jax.random.normal(ks[7], (1, num_classes), jnp.float32) * 0.01
    return (w1, b1, w2, b2, w3, b3, wl, bl)


if __name__ == "__main__":
    key = jax.random.PRNGKey(0)

    # Small synthetic graph batch: 4 graphs x 8 nodes = 32 nodes,
    # D=8 input features, hidden=64 (module default), C=4 classes.
    nodes_per_graph = 8
    G = 4
    N = G * nodes_per_graph
    D, H, C = 8, 64, 4

    k_x, k_p = jax.random.split(key)
    x = jax.random.normal(k_x, (N, D), jnp.float32)

    # edge_index: bidirectional ring within each graph, offset per graph
    edges = []
    for g in range(G):
        off = g * nodes_per_graph
        for i in range(nodes_per_graph):
            j = (i + 1) % nodes_per_graph
            edges.append((off + i, off + j))
            edges.append((off + j, off + i))
    edge_index = jnp.array(edges, dtype=jnp.int32).T        # (2, E)

    # batch vector: nodes -> graph ids
    batch = jnp.repeat(jnp.arange(G, dtype=jnp.int32), nodes_per_graph)

    a_hat = build_norm_adj(edge_index, N)                    # (N, N)
    pool = build_pool_matrix(batch, G)                       # (G, N)
    params = init_params(k_p, D, H, C)

    out = gcn_forward(a_hat, pool, x, params)                # (G, C)
    jax.block_until_ready(out)

    ref = gcn_reference(a_hat, pool, x, params)
    err = float(jnp.max(jnp.abs(out - ref)))

    assert out.shape == (G, C)
    assert bool(jnp.all(jnp.isfinite(out)))
    # bf16 operands with f32 accumulation: loose tolerance vs. pure-f32 ref.
    assert err < 2e-1, f"max abs err vs f32 reference: {err}"
    print("KERNEL_OK")
</pallas_src>

<mosaic_0001>
module attributes {stable_mosaic.version = 11 : i64} {
  func.func @_gcn_layer_kernel(%arg0: i32, %arg1: i32, %arg2: memref<128x128xbf16, #tpu.memory_space<vmem>>, %arg3: memref<128x128xbf16, #tpu.memory_space<vmem>>, %arg4: memref<128x128xbf16, #tpu.memory_space<vmem>>, %arg5: memref<1x128xf32, #tpu.memory_space<vmem>>, %arg6: memref<128x128xbf16, #tpu.memory_space<vmem>>, %arg7: memref<128x128xf32, #tpu.memory_space<vmem>>) attributes {dimension_semantics = [#tpu.dimension_semantics<parallel>, #tpu.dimension_semantics<arbitrary>], iteration_bounds = array<i64: 1, 1>, scalar_prefetch = 0 : i64, scratch_operands = 1 : i64, tpu.core_type = #tpu.core_type<tc>, window_params = [{transform_indices = @transform_0, window_bounds = array<i64: 128, 128>}, {transform_indices = @transform_1, window_bounds = array<i64: 128, 128>}, {pipeline_mode = #tpu.pipeline_mode<synchronous>, transform_indices = @transform_2, window_bounds = array<i64: 128, 128>}, {pipeline_mode = #tpu.pipeline_mode<synchronous>, transform_indices = @transform_3, window_bounds = array<i64: 1, 128>}, {transform_indices = @transform_4, window_bounds = array<i64: 128, 128>}]} {
    %c0_i32 = arith.constant 0 : i32
    %0 = arith.cmpi eq, %arg1, %c0_i32 : i32
    %1 = arith.extui %0 : i1 to i32
    %c0_i32_0 = arith.constant 0 : i32
    %2 = arith.cmpi ne, %1, %c0_i32_0 : i32
    scf.if %2 {
      %cst_13 = arith.constant 0.000000e+00 : f32
      %15 = vector.broadcast %cst_13 : f32 to vector<128x128xf32>
      %c0_14 = arith.constant 0 : index
      %c0_15 = arith.constant 0 : index
      %16 = vector.load %arg7[%c0_14, %c0_15] : memref<128x128xf32, #tpu.memory_space<vmem>>, vector<128x128xf32>
      tpu.vector_store %arg7[%c0_14, %c0_15], %15 {strides = array<i32>} : memref<128x128xf32, #tpu.memory_space<vmem>>, vector<128x128xf32>,
    } else {
    }
    %c0 = arith.constant 0 : index
    %c0_1 = arith.constant 0 : index
    %3 = vector.load %arg3[%c0, %c0_1] : memref<128x128xbf16, #tpu.memory_space<vmem>>, vector<128x128xbf16>
    %c0_2 = arith.constant 0 : index
    %c0_3 = arith.constant 0 : index
    %4 = vector.load %arg4[%c0_2, %c0_3] : memref<128x128xbf16, #tpu.memory_space<vmem>>, vector<128x128xbf16>
    %cst = arith.constant dense<0.000000e+00> : vector<128x128xf32>
    %5 = tpu.matmul %3, %4, %cst {dimension_numbers = #tpu.dot_dimension_numbers<[1], [0], [0], [1], [0, 0, 1, 1], [], []>} : vector<128x128xbf16>, vector<128x128xbf16>, vector<128x128xf32> -> vector<128x128xf32>
    %6 = arith.truncf %5 : vector<128x128xf32> to vector<128x128xbf16>
    %c0_4 = arith.constant 0 : index
    %c0_5 = arith.constant 0 : index
    %7 = vector.load %arg7[%c0_4, %c0_5] : memref<128x128xf32, #tpu.memory_space<vmem>>, vector<128x128xf32>
    %c0_6 = arith.constant 0 : index
    %c0_7 = arith.constant 0 : index
    %8 = vector.load %arg2[%c0_6, %c0_7] : memref<128x128xbf16, #tpu.memory_space<vmem>>, vector<128x128xbf16>
    %cst_8 = arith.constant dense<0.000000e+00> : vector<128x128xf32>
    %9 = tpu.matmul %8, %6, %cst_8 {dimension_numbers = #tpu.dot_dimension_numbers<[1], [0], [0], [1], [0, 0, 1, 1], [], []>} : vector<128x128xbf16>, vector<128x128xbf16>, vector<128x128xf32> -> vector<128x128xf32>
    %10 = arith.addf %7, %9 : vector<128x128xf32>
    %c0_9 = arith.constant 0 : index
    %c0_10 = arith.constant 0 : index
    %11 = vector.load %arg7[%c0_9, %c0_10] : memref<128x128xf32, #tpu.memory_space<vmem>>, vector<128x128xf32>
    tpu.vector_store %arg7[%c0_9, %c0_10], %10 {strides = array<i32>} : memref<128x128xf32, #tpu.memory_space<vmem>>, vector<128x128xf32>,
    %c0_i32_11 = arith.constant 0 : i32
    %12 = arith.cmpi eq, %arg1, %c0_i32_11 : i32
    %13 = arith.extui %12 : i1 to i32
    %c0_i32_12 = arith.constant 0 : i32
    %14 = arith.cmpi ne, %13, %c0_i32_12 : i32
    scf.if %14 {
      %c0_13 = arith.constant 0 : index
      %c0_14 = arith.constant 0 : index
      %15 = vector.load %arg7[%c0_13, %c0_14] : memref<128x128xf32, #tpu.memory_space<vmem>>, vector<128x128xf32>
      %c0_15 = arith.constant 0 : index
      %c0_16 = arith.constant 0 : index
      %16 = vector.load %arg5[%c0_15, %c0_16] : memref<1x128xf32, #tpu.memory_space<vmem>>, vector<1x128xf32>
      %17 = vector.broadcast %16 : vector<1x128xf32> to vector<128x128xf32>
      %18 = arith.addf %15, %17 : vector<128x128xf32>
      %19 = arith.truncf %18 : vector<128x128xf32> to vector<128x128xbf16>
      %c0_17 = arith.constant 0 : index
      %c0_18 = arith.constant 0 : index
      %20 = vector.load %arg6[%c0_17, %c0_18] : memref<128x128xbf16, #tpu.memory_space<vmem>>, vector<128x128xbf16>
      tpu.vector_store %arg6[%c0_17, %c0_18], %19 {strides = array<i32>} : memref<128x128xbf16, #tpu.memory_space<vmem>>, vector<128x128xbf16>,
    } else {
    }
    return
  }
  func.func @transform_0(%arg0: i32, %arg1: i32) -> (i32, i32) {
    %c0_i32 = arith.constant 0 : i32
    return %arg0, %arg1 : i32, i32
  }
  func.func @transform_1(%arg0: i32, %arg1: i32) -> (i32, i32) {
    %c0_i32 = arith.constant 0 : i32
    %c0_i32_0 = arith.constant 0 : i32
    return %arg1, %c0_i32 : i32, i32
  }
  func.func @transform_2(%arg0: i32, %arg1: i32) -> (i32, i32) {
    %c0_i32 = arith.constant 0 : i32
    %c0_i32_0 = arith.constant 0 : i32
    %c0_i32_1 = arith.constant 0 : i32
    return %c0_i32, %c0_i32_0 : i32, i32
  }
  func.func @transform_3(%arg0: i32, %arg1: i32) -> (i32, i32) {
    %c0_i32 = arith.constant 0 : i32
    %c0_i32_0 = arith.constant 0 : i32
    %c0_i32_1 = arith.constant 0 : i32
    return %c0_i32, %c0_i32_0 : i32, i32
  }
  func.func @transform_4(%arg0: i32, %arg1: i32) -> (i32, i32) {
    %c0_i32 = arith.constant 0 : i32
    %c0_i32_0 = arith.constant 0 : i32
    return %arg0, %c0_i32 : i32, i32
  }
}

module attributes {stable_mosaic.version = 11 : i64} {
  func.func @_gcn_final_kernel(%arg0: i32, %arg1: i32, %arg2: memref<128x128xbf16, #tpu.memory_space<vmem>>, %arg3: memref<128x128xbf16, #tpu.memory_space<vmem>>, %arg4: memref<128x128xbf16, #tpu.memory_space<vmem>>, %arg5: memref<1x128xf32, #tpu.memory_space<vmem>>, %arg6: memref<8x128xbf16, #tpu.memory_space<vmem>>, %arg7: memref<128x128xbf16, #tpu.memory_space<vmem>>, %arg8: memref<1x128xf32, #tpu.memory_space<vmem>>, %arg9: memref<8x128xf32, #tpu.memory_space<vmem>>, %arg10: memref<128x128xf32, #tpu.memory_space<vmem>>, %arg11: memref<8x128xf32, #tpu.memory_space<vmem>>) attributes {dimension_semantics = [#tpu.dimension_semantics<arbitrary>, #tpu.dimension_semantics<arbitrary>], iteration_bounds = array<i64: 1, 1>, scalar_prefetch = 0 : i64, scratch_operands = 2 : i64, tpu.core_type = #tpu.core_type<tc>, window_params = [{transform_indices = @transform_0, window_bounds = array<i64: 128, 128>}, {transform_indices = @transform_1, window_bounds = array<i64: 128, 128>}, {pipeline_mode = #tpu.pipeline_mode<synchronous>, transform_indices = @transform_2, window_bounds = array<i64: 128, 128>}, {pipeline_mode = #tpu.pipeline_mode<synchronous>, transform_indices = @transform_3, window_bounds = array<i64: 1, 128>}, {transform_indices = @transform_4, window_bounds = array<i64: 8, 128>}, {pipeline_mode = #tpu.pipeline_mode<synchronous>, transform_indices = @transform_5, window_bounds = array<i64: 128, 128>}, {pipeline_mode = #tpu.pipeline_mode<synchronous>, transform_indices = @transform_6, window_bounds = array<i64: 1, 128>}, {pipeline_mode = #tpu.pipeline_mode<synchronous>, transform_indices = @transform_7, window_bounds = array<i64: 8, 128>}]} {
    %c0_i32 = arith.constant 0 : i32
    %0 = arith.cmpi eq, %arg0, %c0_i32 : i32
    %c0_i32_0 = arith.constant 0 : i32
    %1 = arith.cmpi eq, %arg1, %c0_i32_0 : i32
    %2 = arith.andi %0, %1 : i1
    %3 = arith.extui %2 : i1 to i32
    %c0_i32_1 = arith.constant 0 : i32
    %4 = arith.cmpi ne, %3, %c0_i32_1 : i32
    scf.if %4 {
      %cst_19 = arith.constant 0.000000e+00 : f32
      %25 = vector.broadcast %cst_19 : f32 to vector<8x128xf32>
      %c0_20 = arith.constant 0 : index
      %c0_21 = arith.constant 0 : index
      %26 = vector.load %arg11[%c0_20, %c0_21] : memref<8x128xf32, #tpu.memory_space<vmem>>, vector<8x128xf32>
      tpu.vector_store %arg11[%c0_20, %c0_21], %25 {strides = array<i32>} : memref<8x128xf32, #tpu.memory_space<vmem>>, vector<8x128xf32>,
    } else {
    }
    %c0_i32_2 = arith.constant 0 : i32
    %5 = arith.cmpi eq, %arg1, %c0_i32_2 : i32
    %6 = arith.extui %5 : i1 to i32
    %c0_i32_3 = arith.constant 0 : i32
    %7 = arith.cmpi ne, %6, %c0_i32_3 : i32
    scf.if %7 {
      %cst_19 = arith.constant 0.000000e+00 : f32
      %25 = vector.broadcast %cst_19 : f32 to vector<128x128xf32>
      %c0_20 = arith.constant 0 : index
      %c0_21 = arith.constant 0 : index
      %26 = vector.load %arg10[%c0_20, %c0_21] : memref<128x128xf32, #tpu.memory_space<vmem>>, vector<128x128xf32>
      tpu.vector_store %arg10[%c0_20, %c0_21], %25 {strides = array<i32>} : memref<128x128xf32, #tpu.memory_space<vmem>>, vector<128x128xf32>,
    } else {
    }
    %c0 = arith.constant 0 : index
    %c0_4 = arith.constant 0 : index
    %8 = vector.load %arg3[%c0, %c0_4] : memref<128x128xbf16, #tpu.memory_space<vmem>>, vector<128x128xbf16>
    %c0_5 = arith.constant 0 : index
    %c0_6 = arith.constant 0 : index
    %9 = vector.load %arg4[%c0_5, %c0_6] : memref<128x128xbf16, #tpu.memory_space<vmem>>, vector<128x128xbf16>
    %cst = arith.constant dense<0.000000e+00> : vector<128x128xf32>
    %10 = tpu.matmul %8, %9, %cst {dimension_numbers = #tpu.dot_dimension_numbers<[1], [0], [0], [1], [0, 0, 1, 1], [], []>} : vector<128x128xbf16>, vector<128x128xbf16>, vector<128x128xf32> -> vector<128x128xf32>
    %11 = arith.truncf %10 : vector<128x128xf32> to vector<128x128xbf16>
    %c0_7 = arith.constant 0 : index
    %c0_8 = arith.constant 0 : index
    %12 = vector.load %arg10[%c0_7, %c0_8] : memref<128x128xf32, #tpu.memory_space<vmem>>, vector<128x128xf32>
    %c0_9 = arith.constant 0 : index
    %c0_10 = arith.constant 0 : index
    %13 = vector.load %arg2[%c0_9, %c0_10] : memref<128x128xbf16, #tpu.memory_space<vmem>>, vector<128x128xbf16>
    %cst_11 = arith.constant dense<0.000000e+00> : vector<128x128xf32>
    %14 = tpu.matmul %13, %11, %cst_11 {dimension_numbers = #tpu.dot_dimension_numbers<[1], [0], [0], [1], [0, 0, 1, 1], [], []>} : vector<128x128xbf16>, vector<128x128xbf16>, vector<128x128xf32> -> vector<128x128xf32>
    %15 = arith.addf %12, %14 : vector<128x128xf32>
    %c0_12 = arith.constant 0 : index
    %c0_13 = arith.constant 0 : index
    %16 = vector.load %arg10[%c0_12, %c0_13] : memref<128x128xf32, #tpu.memory_space<vmem>>, vector<128x128xf32>
    tpu.vector_store %arg10[%c0_12, %c0_13], %15 {strides = array<i32>} : memref<128x128xf32, #tpu.memory_space<vmem>>, vector<128x128xf32>,
    %c0_i32_14 = arith.constant 0 : i32
    %17 = arith.cmpi eq, %arg1, %c0_i32_14 : i32
    %18 = arith.extui %17 : i1 to i32
    %c0_i32_15 = arith.constant 0 : i32
    %19 = arith.cmpi ne, %18, %c0_i32_15 : i32
    scf.if %19 {
      %c0_19 = arith.constant 0 : index
      %c0_20 = arith.constant 0 : index
      %25 = vector.load %arg10[%c0_19, %c0_20] : memref<128x128xf32, #tpu.memory_space<vmem>>, vector<128x128xf32>
      %c0_21 = arith.constant 0 : index
      %c0_22 = arith.constant 0 : index
      %26 = vector.load %arg5[%c0_21, %c0_22] : memref<1x128xf32, #tpu.memory_space<vmem>>, vector<1x128xf32>
      %27 = vector.broadcast %26 : vector<1x128xf32> to vector<128x128xf32>
      %28 = arith.addf %25, %27 : vector<128x128xf32>
      %29 = arith.truncf %28 : vector<128x128xf32> to vector<128x128xbf16>
      %c0_23 = arith.constant 0 : index
      %c0_24 = arith.constant 0 : index
      %30 = vector.load %arg11[%c0_23, %c0_24] : memref<8x128xf32, #tpu.memory_space<vmem>>, vector<8x128xf32>
      %c0_25 = arith.constant 0 : index
      %c0_26 = arith.constant 0 : index
      %31 = vector.load %arg6[%c0_25, %c0_26] : memref<8x128xbf16, #tpu.memory_space<vmem>>, vector<8x128xbf16>
      %cst_27 = arith.constant dense<0.000000e+00> : vector<8x128xf32>
      %32 = tpu.matmul %31, %29, %cst_27 {dimension_numbers = #tpu.dot_dimension_numbers<[1], [0], [0], [1], [0, 0, 1, 1], [], []>} : vector<8x128xbf16>, vector<128x128xbf16>, vector<8x128xf32> -> vector<8x128xf32>
      %33 = arith.addf %30, %32 : vector<8x128xf32>
      %c0_28 = arith.constant 0 : index
      %c0_29 = arith.constant 0 : index
      %34 = vector.load %arg11[%c0_28, %c0_29] : memref<8x128xf32, #tpu.memory_space<vmem>>, vector<8x128xf32>
      tpu.vector_store %arg11[%c0_28, %c0_29], %33 {strides = array<i32>} : memref<8x128xf32, #tpu.memory_space<vmem>>, vector<8x128xf32>,
    } else {
    }
    %c0_i32_16 = arith.constant 0 : i32
    %20 = arith.cmpi eq, %arg0, %c0_i32_16 : i32
    %c0_i32_17 = arith.constant 0 : i32
    %21 = arith.cmpi eq, %arg1, %c0_i32_17 : i32
    %22 = arith.andi %20, %21 : i1
    %23 = arith.extui %22 : i1 to i32
    %c0_i32_18 = arith.constant 0 : i32
    %24 = arith.cmpi ne, %23, %c0_i32_18 : i32
    scf.if %24 {
      %c0_19 = arith.constant 0 : index
      %c0_20 = arith.constant 0 : index
      %25 = vector.load %arg11[%c0_19, %c0_20] : memref<8x128xf32, #tpu.memory_space<vmem>>, vector<8x128xf32>
      %26 = arith.truncf %25 : vector<8x128xf32> to vector<8x128xbf16>
      %c0_21 = arith.constant 0 : index
      %c0_22 = arith.constant 0 : index
      %27 = vector.load %arg7[%c0_21, %c0_22] : memref<128x128xbf16, #tpu.memory_space<vmem>>, vector<128x128xbf16>
      %cst_23 = arith.constant dense<0.000000e+00> : vector<8x128xf32>
      %28 = tpu.matmul %26, %27, %cst_23 {dimension_numbers = #tpu.dot_dimension_numbers<[1], [0], [0], [1], [0, 0, 1, 1], [], []>} : vector<8x128xbf16>, vector<128x128xbf16>, vector<8x128xf32> -> vector<8x128xf32>
      %c0_24 = arith.constant 0 : index
      %c0_25 = arith.constant 0 : index
      %29 = vector.load %arg8[%c0_24, %c0_25] : memref<1x128xf32, #tpu.memory_space<vmem>>, vector<1x128xf32>
      %30 = vector.broadcast %29 : vector<1x128xf32> to vector<8x128xf32>
      %31 = arith.addf %28, %30 : vector<8x128xf32>
      %c0_26 = arith.constant 0 : index
      %c0_27 = arith.constant 0 : index
      %32 = vector.load %arg9[%c0_26, %c0_27] : memref<8x128xf32, #tpu.memory_space<vmem>>, vector<8x128xf32>
      tpu.vector_store %arg9[%c0_26, %c0_27], %31 {strides = array<i32>} : memref<8x128xf32, #tpu.memory_space<vmem>>, vector<8x128xf32>,
    } else {
    }
    return
  }
  func.func @transform_0(%arg0: i32, %arg1: i32) -> (i32, i32) {
    %c0_i32 = arith.constant 0 : i32
    return %arg0, %arg1 : i32, i32
  }
  func.func @transform_1(%arg0: i32, %arg1: i32) -> (i32, i32) {
    %c0_i32 = arith.constant 0 : i32
    %c0_i32_0 = arith.constant 0 : i32
    return %arg1, %c0_i32 : i32, i32
  }
  func.func @transform_2(%arg0: i32, %arg1: i32) -> (i32, i32) {
    %c0_i32 = arith.constant 0 : i32
    %c0_i32_0 = arith.constant 0 : i32
    %c0_i32_1 = arith.constant 0 : i32
    return %c0_i32, %c0_i32_0 : i32, i32
  }
  func.func @transform_3(%arg0: i32, %arg1: i32) -> (i32, i32) {
    %c0_i32 = arith.constant 0 : i32
    %c0_i32_0 = arith.constant 0 : i32
    %c0_i32_1 = arith.constant 0 : i32
    return %c0_i32, %c0_i32_0 : i32, i32
  }
  func.func @transform_4(%arg0: i32, %arg1: i32) -> (i32, i32) {
    %c0_i32 = arith.constant 0 : i32
    %c0_i32_0 = arith.constant 0 : i32
    return %c0_i32, %arg0 : i32, i32
  }
  func.func @transform_5(%arg0: i32, %arg1: i32) -> (i32, i32) {
    %c0_i32 = arith.constant 0 : i32
    %c0_i32_0 = arith.constant 0 : i32
    %c0_i32_1 = arith.constant 0 : i32
    return %c0_i32, %c0_i32_0 : i32, i32
  }
  func.func @transform_6(%arg0: i32, %arg1: i32) -> (i32, i32) {
    %c0_i32 = arith.constant 0 : i32
    %c0_i32_0 = arith.constant 0 : i32
    %c0_i32_1 = arith.constant 0 : i32
    return %c0_i32, %c0_i32_0 : i32, i32
  }
  func.func @transform_7(%arg0: i32, %arg1: i32) -> (i32, i32) {
    %c0_i32 = arith.constant 0 : i32
    %c0_i32_0 = arith.constant 0 : i32
    %c0_i32_1 = arith.constant 0 : i32
    return %c0_i32, %c0_i32_0 : i32, i32
  }
}

</mosaic_0001>

<llo_original>
// kernel: gcn_forward.3
$region0: #{gcn_forward.3}
  #allocation0 [shape = 'u32[]', space=smem, size = 0x4, offset = 0x4, fixed_abs, tag = 'smem constant byte address 0x4 - core index']
  #allocation1 [shape = 'u32[72,128]{1,0:T(1,128)}', space=vmem, size = 0x9000, scoped, tag = 'internal scratch']
  #allocation2 [shape = 'f32[128,128]{1,0:T(8,128)}', space=vmem, size = 0x10000, scoped, tag = 'scratch operand']
  %s0 = inlined_call_operand.vmem [shape: bf16[128,128], index: 0, kind: input, shape index: {}]
  %s1 = inlined_call_operand.vmem [shape: bf16[128,128], index: 1, kind: input, shape index: {}]
  %s2 = inlined_call_operand.vmem [shape: bf16[128,128], index: 2, kind: input, shape index: {}]
  %s3 = inlined_call_operand.vmem [shape: f32[1,128], index: 3, kind: input, shape index: {}]
  %s4 = inlined_call_operand.vmem [shape: bf16[128,128], index: 4, kind: output, shape index: {}]
  %s5 = sld [smem:[#allocation0]]
  $region34: #{gcn_forward.3} parent=0
    _
  %s7 = ssub.s32 1, %s5
  %s8 = scalar_select 0, %s7, %s5
  // Predicated region
  $region2: #{gcn_forward.3} parent=0 // pred_check
    _
  $region3: #{gcn_forward.3} parent=0 // pred_check_branch
    %10 = sbr.rel (0) target = $region5
  $region4: #{gcn_forward.3} parent=0 // pred_region
    _
  $region5: #{gcn_forward.3} parent=0 // pred_fallthru
    _
  // Predicated region
  $region6: #{gcn_forward.3} parent=0 // pred_check
    _
  $region7: #{gcn_forward.3} parent=0 // pred_check_branch
    %12 = sbr.rel (0) target = $region9
  $region8: #{gcn_forward.3} parent=0 // pred_region
    _
  $region9: #{gcn_forward.3} parent=0 // pred_fallthru
    _
  // Predicated region
  $region10: #{gcn_forward.3} parent=0 // pred_check
    _
  $region11: #{gcn_forward.3} parent=0 // pred_check_branch
    %14 = sbr.rel (0) target = $region13
  $region12: #{gcn_forward.3} parent=0 // pred_region
    _
  $region13: #{gcn_forward.3} parent=0 // pred_fallthru
    _
  // Predicated region
  $region14: #{gcn_forward.3} parent=0 // pred_check
    _
  $region15: #{gcn_forward.3} parent=0 // pred_check_branch
    %16 = sbr.rel (0) target = $region17
  $region16: #{gcn_forward.3} parent=0 // pred_region
    _
  $region17: #{gcn_forward.3} parent=0 // pred_fallthru
    _
  %p17 = scmp.eq.s32.totalorder 0, 0
  // Predicated region
  $region18: #{gcn_forward.3} parent=0 // pred_check
    %p18 = pneg %p17
  $region19: #{gcn_forward.3} parent=0 // pred_check_branch
    %20 = sbr.rel (%p18) target = $region21
  $region20: #{gcn_forward.3} parent=0 // pred_region
    %21 = vst [vmem:[#allocation2] sm:$0xff] 0.0
    %22 = vst [vmem:[#allocation2 + $0x8] sm:$0xff] 0.0
    %23 = vst [vmem:[#allocation2 + $0x10] sm:$0xff] 0.0
    %24 = vst [vmem:[#allocation2 + $0x18] sm:$0xff] 0.0
    %25 = vst [vmem:[#allocation2 + $0x20] sm:$0xff] 0.0
    %26 = vst [vmem:[#allocation2 + $0x28] sm:$0xff] 0.0
    %27 = vst [vmem:[#allocation2 + $0x30] sm:$0xff] 0.0
    %28 = vst [vmem:[#allocation2 + $0x38] sm:$0xff] 0.0
    %29 = vst [vmem:[#allocation2 + $0x40] sm:$0xff] 0.0
    %30 = vst [vmem:[#allocation2 + $0x48] sm:$0xff] 0.0
    %31 = vst [vmem:[#allocation2 + $0x50] sm:$0xff] 0.0
    %32 = vst [vmem:[#allocation2 + $0x58] sm:$0xff] 0.0
    %33 = vst [vmem:[#allocation2 + $0x60] sm:$0xff] 0.0
    %34 = vst [vmem:[#allocation2 + $0x68] sm:$0xff] 0.0
    %35 = vst [vmem:[#allocation2 + $0x70] sm:$0xff] 0.0
    %36 = vst [vmem:[#allocation2 + $0x78] sm:$0xff] 0.0
  $region21: #{gcn_forward.3} parent=0 // pred_fallthru
    _
  %v37 = vld [vmem:[%s1] sm:$0xf]
  %v38 = vld [vmem:[%s1 + $0x4] sm:$0xf]
  %v39 = vld [vmem:[%s1 + $0x8] sm:$0xf]
  %v40 = vld [vmem:[%s1 + $0xc] sm:$0xf]
  %v41 = vld [vmem:[%s1 + $0x10] sm:$0xf]
  %v42 = vld [vmem:[%s1 + $0x14] sm:$0xf]
  %v43 = vld [vmem:[%s1 + $0x18] sm:$0xf]
  %v44 = vld [vmem:[%s1 + $0x1c] sm:$0xf]
  %v45 = vld [vmem:[%s1 + $0x20] sm:$0xf]
  %v46 = vld [vmem:[%s1 + $0x24] sm:$0xf]
  %v47 = vld [vmem:[%s1 + $0x28] sm:$0xf]
  %v48 = vld [vmem:[%s1 + $0x2c] sm:$0xf]
  %v49 = vld [vmem:[%s1 + $0x30] sm:$0xf]
  %v50 = vld [vmem:[%s1 + $0x34] sm:$0xf]
  %v51 = vld [vmem:[%s1 + $0x38] sm:$0xf]
  %v52 = vld [vmem:[%s1 + $0x3c] sm:$0xf]
  %v53 = vld [vmem:[%s2] sm:$0xf]
  %v54 = vld [vmem:[%s2 + $0x4] sm:$0xf]
  %v55 = vld [vmem:[%s2 + $0x8] sm:$0xf]
  %v56 = vld [vmem:[%s2 + $0xc] sm:$0xf]
  %v57 = vld [vmem:[%s2 + $0x10] sm:$0xf]
  %v58 = vld [vmem:[%s2 + $0x14] sm:$0xf]
  %v59 = vld [vmem:[%s2 + $0x18] sm:$0xf]
  %v60 = vld [vmem:[%s2 + $0x1c] sm:$0xf]
  %v61 = vld [vmem:[%s2 + $0x20] sm:$0xf]
  %v62 = vld [vmem:[%s2 + $0x24] sm:$0xf]
  %v63 = vld [vmem:[%s2 + $0x28] sm:$0xf]
  %v64 = vld [vmem:[%s2 + $0x2c] sm:$0xf]
  %v65 = vld [vmem:[%s2 + $0x30] sm:$0xf]
  %v66 = vld [vmem:[%s2 + $0x34] sm:$0xf]
  %v67 = vld [vmem:[%s2 + $0x38] sm:$0xf]
  %v68 = vld [vmem:[%s2 + $0x3c] sm:$0xf]
  %v85 = vunpack.c.l.b16 %v37
  %v86 = vunpack.c.l.b16 %v38
  %v87 = vunpack.c.l.b16 %v39
  %v88 = vunpack.c.l.b16 %v40
  %v89 = vunpack.c.l.b16 %v41
  %v90 = vunpack.c.l.b16 %v42
  %v91 = vunpack.c.l.b16 %v43
  %v92 = vunpack.c.l.b16 %v44
  %v93 = vunpack.c.l.b16 %v45
  %v94 = vunpack.c.l.b16 %v46
  %v95 = vunpack.c.l.b16 %v47
  %v96 = vunpack.c.l.b16 %v48
  %v97 = vunpack.c.l.b16 %v49
  %v98 = vunpack.c.l.b16 %v50
  %v99 = vunpack.c.l.b16 %v51
  %v100 = vunpack.c.l.b16 %v52
  %v101 = vpack.c.b16 %v86, %v85
  %v102 = vpack.c.b16 %v88, %v87
  %v103 = vpack.c.b16 %v90, %v89
  %v104 = vpack.c.b16 %v92, %v91
  %v105 = vpack.c.b16 %v94, %v93
  %v106 = vpack.c.b16 %v96, %v95
  %v107 = vpack.c.b16 %v98, %v97
  %v108 = vpack.c.b16 %v100, %v99
  %v133 = vunpack.c.l.b16 %v53
  %v134 = vunpack.c.l.b16 %v54
  %v135 = vunpack.c.l.b16 %v55
  %v136 = vunpack.c.l.b16 %v56
  %v137 = vunpack.c.l.b16 %v57
  %v138 = vunpack.c.l.b16 %v58
  %v139 = vunpack.c.l.b16 %v59
  %v140 = vunpack.c.l.b16 %v60
  %v141 = vunpack.c.l.b16 %v61
  %v142 = vunpack.c.l.b16 %v62
  %v143 = vunpack.c.l.b16 %v63
  %v144 = vunpack.c.l.b16 %v64
  %v145 = vunpack.c.l.b16 %v65
  %v146 = vunpack.c.l.b16 %v66
  %v147 = vunpack.c.l.b16 %v67
  %v148 = vunpack.c.l.b16 %v68
  %v149 = vpack.c.b16 %v134, %v133
  %v150 = vpack.c.b16 %v136, %v135
  %v151 = vpack.c.b16 %v138, %v137
  %v152 = vpack.c.b16 %v140, %v139
  %v153 = vpack.c.b16 %v142, %v141
  %v154 = vpack.c.b16 %v144, %v143
  %v155 = vpack.c.b16 %v146, %v145
  %v156 = vpack.c.b16 %v148, %v147
  %165 = vmatpush.bf16.msra.mxu0 %v156
  %166 = vmatpush.bf16.msra.mxu0 %v155
  %167 = vmatpush.bf16.msra.mxu0 %v154
  %168 = vmatpush.bf16.msra.mxu0 %v153
  %169 = vmatpush.bf16.msra.mxu0 %v152
  %170 = vmatpush.bf16.msra.mxu0 %v151
  %171 = vmatpush.bf16.msra.mxu0 %v150
  %172 = vmatpush.bf16.msra.mxu0 %v149
  %173 = vmatmul.bf16.gmra.mxu0 %v101
  %v174 = vpop.f32.mrf.mxu0
  %v175 = vadd.f32 0.0, %v174
  %v176 = vpop.f32.mrf.mxu0
  %v177 = vadd.f32 0.0, %v176
  %178 = vmatmul.bf16.gmra.mxu0 %v102
  %v179 = vpop.f32.mrf.mxu0
  %v180 = vadd.f32 0.0, %v179
  %v181 = vpop.f32.mrf.mxu0
  %v182 = vadd.f32 0.0, %v181
  %183 = vmatmul.bf16.gmra.mxu0 %v103
  %v184 = vpop.f32.mrf.mxu0
  %v185 = vadd.f32 0.0, %v184
  %v186 = vpop.f32.mrf.mxu0
  %v187 = vadd.f32 0.0, %v186
  %188 = vmatmul.bf16.gmra.mxu0 %v104
  %v189 = vpop.f32.mrf.mxu0
  %v190 = vadd.f32 0.0, %v189
  %v191 = vpop.f32.mrf.mxu0
  %v192 = vadd.f32 0.0, %v191
  %193 = vmatmul.bf16.gmra.mxu0 %v105
  %v194 = vpop.f32.mrf.mxu0
  %v195 = vadd.f32 0.0, %v194
  %v196 = vpop.f32.mrf.mxu0
  %v197 = vadd.f32 0.0, %v196
  %198 = vmatmul.bf16.gmra.mxu0 %v106
  %v199 = vpop.f32.mrf.mxu0
  %v200 = vadd.f32 0.0, %v199
  %v201 = vpop.f32.mrf.mxu0
  %v202 = vadd.f32 0.0, %v201
  %203 = vmatmul.bf16.gmra.mxu0 %v107
  %v204 = vpop.f32.mrf.mxu0
  %v205 = vadd.f32 0.0, %v204
  %v206 = vpop.f32.mrf.mxu0
  %v207 = vadd.f32 0.0, %v206
  %208 = vmatmul.bf16.gmra.mxu0 %v108
  %v209 = vpop.f32.mrf.mxu0
  %v210 = vadd.f32 0.0, %v209
  %v211 = vpop.f32.mrf.mxu0
  %v212 = vadd.f32 0.0, %v211
  %213 = vdwg.mxu0
  %v214 = vpack.c.bf16 %v177, %v175
  %v215 = vpack.c.bf16 %v182, %v180
  %v216 = vpack.c.bf16 %v187, %v185
  %v217 = vpack.c.bf16 %v192, %v190
  %v218 = vpack.c.bf16 %v197, %v195
  %v219 = vpack.c.bf16 %v202, %v200
  %v220 = vpack.c.bf16 %v207, %v205
  %v221 = vpack.c.bf16 %v212, %v210
  %v222 = vld [vmem:[#allocation2] sm:$0xff]
  %v223 = vld [vmem:[#allocation2 + $0x8] sm:$0xff]
  %v224 = vld [vmem:[#allocation2 + $0x10] sm:$0xff]
  %v225 = vld [vmem:[#allocation2 + $0x18] sm:$0xff]
  %v226 = vld [vmem:[#allocation2 + $0x20] sm:$0xff]
  %v227 = vld [vmem:[#allocation2 + $0x28] sm:$0xff]
  %v228 = vld [vmem:[#allocation2 + $0x30] sm:$0xff]
  %v229 = vld [vmem:[#allocation2 + $0x38] sm:$0xff]
  %v230 = vld [vmem:[#allocation2 + $0x40] sm:$0xff]
  %v231 = vld [vmem:[#allocation2 + $0x48] sm:$0xff]
  %v232 = vld [vmem:[#allocation2 + $0x50] sm:$0xff]
  %v233 = vld [vmem:[#allocation2 + $0x58] sm:$0xff]
  %v234 = vld [vmem:[#allocation2 + $0x60] sm:$0xff]
  %v235 = vld [vmem:[#allocation2 + $0x68] sm:$0xff]
  %v236 = vld [vmem:[#allocation2 + $0x70] sm:$0xff]
  %v237 = vld [vmem:[#allocation2 + $0x78] sm:$0xff]
  %v238 = vld [vmem:[%s0] sm:$0xf]
  %v239 = vld [vmem:[%s0 + $0x4] sm:$0xf]
  %v240 = vld [vmem:[%s0 + $0x8] sm:$0xf]
  %v241 = vld [vmem:[%s0 + $0xc] sm:$0xf]
  %v242 = vld [vmem:[%s0 + $0x10] sm:$0xf]
  %v243 = vld [vmem:[%s0 + $0x14] sm:$0xf]
  %v244 = vld [vmem:[%s0 + $0x18] sm:$0xf]
  %v245 = vld [vmem:[%s0 + $0x1c] sm:$0xf]
  %v246 = vld [vmem:[%s0 + $0x20] sm:$0xf]
  %v247 = vld [vmem:[%s0 + $0x24] sm:$0xf]
  %v248 = vld [vmem:[%s0 + $0x28] sm:$0xf]
  %v249 = vld [vmem:[%s0 + $0x2c] sm:$0xf]
  %v250 = vld [vmem:[%s0 + $0x30] sm:$0xf]
  %v251 = vld [vmem:[%s0 + $0x34] sm:$0xf]
  %v252 = vld [vmem:[%s0 + $0x38] sm:$0xf]
  %v253 = vld [vmem:[%s0 + $0x3c] sm:$0xf]
  %v270 = vunpack.c.l.b16 %v238
  %v271 = vunpack.c.l.b16 %v239
  %v272 = vunpack.c.l.b16 %v240
  %v273 = vunpack.c.l.b16 %v241
  %v274 = vunpack.c.l.b16 %v242
  %v275 = vunpack.c.l.b16 %v243
  %v276 = vunpack.c.l.b16 %v244
  %v277 = vunpack.c.l.b16 %v245
  %v278 = vunpack.c.l.b16 %v246
  %v279 = vunpack.c.l.b16 %v247
  %v280 = vunpack.c.l.b16 %v248
  %v281 = vunpack.c.l.b16 %v249
  %v282 = vunpack.c.l.b16 %v250
  %v283 = vunpack.c.l.b16 %v251
  %v284 = vunpack.c.l.b16 %v252
  %v285 = vunpack.c.l.b16 %v253
  %v286 = vpack.c.b16 %v271, %v270
  %v287 = vpack.c.b16 %v273, %v272
  %v288 = vpack.c.b16 %v275, %v274
  %v289 = vpack.c.b16 %v277, %v276
  %v290 = vpack.c.b16 %v279, %v278
  %v291 = vpack.c.b16 %v281, %v280
  %v292 = vpack.c.b16 %v283, %v282
  %v293 = vpack.c.b16 %v285, %v284
  %302 = vmatpush.bf16.msra.mxu0 %v221
  %303 = vmatpush.bf16.msra.mxu0 %v220
  %304 = vmatpush.bf16.msra.mxu0 %v219
  %305 = vmatpush.bf16.msra.mxu0 %v218
  %306 = vmatpush.bf16.msra.mxu0 %v217
  %307 = vmatpush.bf16.msra.mxu0 %v216
  %308 = vmatpush.bf16.msra.mxu0 %v215
  %309 = vmatpush.bf16.msra.mxu0 %v214
  %310 = vmatmul.bf16.gmra.mxu0 %v286
  %v311 = vpop.f32.mrf.mxu0
  %v312 = vadd.f32 0.0, %v311
  %v313 = vpop.f32.mrf.mxu0
  %v314 = vadd.f32 0.0, %v313
  %315 = vmatmul.bf16.gmra.mxu0 %v287
  %v316 = vpop.f32.mrf.mxu0
  %v317 = vadd.f32 0.0, %v316
  %v318 = vpop.f32.mrf.mxu0
  %v319 = vadd.f32 0.0, %v318
  %320 = vmatmul.bf16.gmra.mxu0 %v288
  %v321 = vpop.f32.mrf.mxu0
  %v322 = vadd.f32 0.0, %v321
  %v323 = vpop.f32.mrf.mxu0
  %v324 = vadd.f32 0.0, %v323
  %325 = vmatmul.bf16.gmra.mxu0 %v289
  %v326 = vpop.f32.mrf.mxu0
  %v327 = vadd.f32 0.0, %v326
  %v328 = vpop.f32.mrf.mxu0
  %v329 = vadd.f32 0.0, %v328
  %330 = vmatmul.bf16.gmra.mxu0 %v290
  %v331 = vpop.f32.mrf.mxu0
  %v332 = vadd.f32 0.0, %v331
  %v333 = vpop.f32.mrf.mxu0
  %v334 = vadd.f32 0.0, %v333
  %335 = vmatmul.bf16.gmra.mxu0 %v291
  %v336 = vpop.f32.mrf.mxu0
  %v337 = vadd.f32 0.0, %v336
  %v338 = vpop.f32.mrf.mxu0
  %v339 = vadd.f32 0.0, %v338
  %340 = vmatmul.bf16.gmra.mxu0 %v292
  %v341 = vpop.f32.mrf.mxu0
  %v342 = vadd.f32 0.0, %v341
  %v343 = vpop.f32.mrf.mxu0
  %v344 = vadd.f32 0.0, %v343
  %345 = vmatmul.bf16.gmra.mxu0 %v293
  %v346 = vpop.f32.mrf.mxu0
  %v347 = vadd.f32 0.0, %v346
  %v348 = vpop.f32.mrf.mxu0
  %v349 = vadd.f32 0.0, %v348
  %350 = vdwg.mxu0
  %v351 = vadd.f32 %v222, %v312
  %v352 = vadd.f32 %v223, %v314
  %v353 = vadd.f32 %v224, %v317
  %v354 = vadd.f32 %v225, %v319
  %v355 = vadd.f32 %v226, %v322
  %v356 = vadd.f32 %v227, %v324
  %v357 = vadd.f32 %v228, %v327
  %v358 = vadd.f32 %v229, %v329
  %v359 = vadd.f32 %v230, %v332
  %v360 = vadd.f32 %v231, %v334
  %v361 = vadd.f32 %v232, %v337
  %v362 = vadd.f32 %v233, %v339
  %v363 = vadd.f32 %v234, %v342
  %v364 = vadd.f32 %v235, %v344
  %v365 = vadd.f32 %v236, %v347
  %v366 = vadd.f32 %v237, %v349
  %367 = vst [vmem:[#allocation2] sm:$0xff] %v351
  %368 = vst [vmem:[#allocation2 + $0x8] sm:$0xff] %v352
  %369 = vst [vmem:[#allocation2 + $0x10] sm:$0xff] %v353
  %370 = vst [vmem:[#allocation2 + $0x18] sm:$0xff] %v354
  %371 = vst [vmem:[#allocation2 + $0x20] sm:$0xff] %v355
  %372 = vst [vmem:[#allocation2 + $0x28] sm:$0xff] %v356
  %373 = vst [vmem:[#allocation2 + $0x30] sm:$0xff] %v357
  %374 = vst [vmem:[#allocation2 + $0x38] sm:$0xff] %v358
  %375 = vst [vmem:[#allocation2 + $0x40] sm:$0xff] %v359
  %376 = vst [vmem:[#allocation2 + $0x48] sm:$0xff] %v360
  %377 = vst [vmem:[#allocation2 + $0x50] sm:$0xff] %v361
  %378 = vst [vmem:[#allocation2 + $0x58] sm:$0xff] %v362
  %379 = vst [vmem:[#allocation2 + $0x60] sm:$0xff] %v363
  %380 = vst [vmem:[#allocation2 + $0x68] sm:$0xff] %v364
  %381 = vst [vmem:[#allocation2 + $0x70] sm:$0xff] %v365
  %382 = vst [vmem:[#allocation2 + $0x78] sm:$0xff] %v366
  // Predicated region
  $region22: #{gcn_forward.3} parent=0 // pred_check
    %p383 = pneg %p17
  $region23: #{gcn_forward.3} parent=0 // pred_check_branch
    %385 = sbr.rel (%p383) target = $region25
  $region24: #{gcn_forward.3} parent=0 // pred_region
    %v386 = vld [vmem:[#allocation2] sm:$0xff]
    %v387 = vld [vmem:[#allocation2 + $0x8] sm:$0xff]
    %v388 = vld [vmem:[#allocation2 + $0x10] sm:$0xff]
    %v389 = vld [vmem:[#allocation2 + $0x18] sm:$0xff]
    %v390 = vld [vmem:[#allocation2 + $0x20] sm:$0xff]
    %v391 = vld [vmem:[#allocation2 + $0x28] sm:$0xff]
    %v392 = vld [vmem:[#allocation2 + $0x30] sm:$0xff]
    %v393 = vld [vmem:[#allocation2 + $0x38] sm:$0xff]
    %v394 = vld [vmem:[#allocation2 + $0x40] sm:$0xff]
    %v395 = vld [vmem:[#allocation2 + $0x48] sm:$0xff]
    %v396 = vld [vmem:[#allocation2 + $0x50] sm:$0xff]
    %v397 = vld [vmem:[#allocation2 + $0x58] sm:$0xff]
    %v398 = vld [vmem:[#allocation2 + $0x60] sm:$0xff]
    %v399 = vld [vmem:[#allocation2 + $0x68] sm:$0xff]
    %v400 = vld [vmem:[#allocation2 + $0x70] sm:$0xff]
    %v401 = vld [vmem:[#allocation2 + $0x78] sm:$0xff]
    %v402 = vld [vmem:[%s3] sm:$0x1]
    %v404 = vperm.slane %v402, 0
    %v406 = vadd.f32 %v386, %v404
    %v407 = vadd.f32 %v387, %v404
    %v408 = vadd.f32 %v388, %v404
    %v409 = vadd.f32 %v389, %v404
    %v410 = vadd.f32 %v390, %v404
    %v411 = vadd.f32 %v391, %v404
    %v412 = vadd.f32 %v392, %v404
    %v413 = vadd.f32 %v393, %v404
    %v414 = vadd.f32 %v394, %v404
    %v415 = vadd.f32 %v395, %v404
    %v416 = vadd.f32 %v396, %v404
    %v417 = vadd.f32 %v397, %v404
    %v418 = vadd.f32 %v398, %v404
    %v419 = vadd.f32 %v399, %v404
    %v420 = vadd.f32 %v400, %v404
    %v421 = vadd.f32 %v401, %v404
    %v422 = vpack.c.bf16 %v406, %v406
    %v423 = vpack.c.bf16 %v407, %v407
    %v424 = vpack.c.bf16 %v408, %v408
    %v425 = vpack.c.bf16 %v409, %v409
    %v426 = vpack.c.bf16 %v410, %v410
    %v427 = vpack.c.bf16 %v411, %v411
    %v428 = vpack.c.bf16 %v412, %v412
    %v429 = vpack.c.bf16 %v413, %v413
    %v430 = vpack.c.bf16 %v414, %v414
    %v431 = vpack.c.bf16 %v415, %v415
    %v432 = vpack.c.bf16 %v416, %v416
    %v433 = vpack.c.bf16 %v417, %v417
    %v434 = vpack.c.bf16 %v418, %v418
    %v435 = vpack.c.bf16 %v419, %v419
    %v436 = vpack.c.bf16 %v420, %v420
    %v437 = vpack.c.bf16 %v421, %v421
    %438 = vst [vmem:[%s4] sm:$0xf] %v422
    %439 = vst [vmem:[%s4 + $0x4] sm:$0xf] %v423
    %440 = vst [vmem:[%s4 + $0x8] sm:$0xf] %v424
    %441 = vst [vmem:[%s4 + $0xc] sm:$0xf] %v425
    %442 = vst [vmem:[%s4 + $0x10] sm:$0xf] %v426
    %443 = vst [vmem:[%s4 + $0x14] sm:$0xf] %v427
    %444 = vst [vmem:[%s4 + $0x18] sm:$0xf] %v428
    %445 = vst [vmem:[%s4 + $0x1c] sm:$0xf] %v429
    %446 = vst [vmem:[%s4 + $0x20] sm:$0xf] %v430
    %447 = vst [vmem:[%s4 + $0x24] sm:$0xf] %v431
    %448 = vst [vmem:[%s4 + $0x28] sm:$0xf] %v432
    %449 = vst [vmem:[%s4 + $0x2c] sm:$0xf] %v433
    %450 = vst [vmem:[%s4 + $0x30] sm:$0xf] %v434
    %451 = vst [vmem:[%s4 + $0x34] sm:$0xf] %v435
    %452 = vst [vmem:[%s4 + $0x38] sm:$0xf] %v436
    %453 = vst [vmem:[%s4 + $0x3c] sm:$0xf] %v437
  $region25: #{gcn_forward.3} parent=0 // pred_fallthru
    _
  // Predicated region
  $region26: #{gcn_forward.3} parent=0 // pred_check
    _
  $region27: #{gcn_forward.3} parent=0 // pred_check_branch
    %455 = sbr.rel (0) target = $region29
  $region28: #{gcn_forward.3} parent=0 // pred_region
    _
  $region29: #{gcn_forward.3} parent=0 // pred_fallthru
    _
  // Predicated region
  $region30: #{gcn_forward.3} parent=0 // pred_check
    _
  $region31: #{gcn_forward.3} parent=0 // pred_check_branch
    %457 = sbr.rel (0) target = $region33
  $region32: #{gcn_forward.3} parent=0 // pred_region
    _
  $region33: #{gcn_forward.3} parent=0 // pred_fallthru
    _

// kernel: gcn_forward.5
$region0: #{gcn_forward.5}
  #allocation0 [shape = 'u32[]', space=smem, size = 0x4, offset = 0x4, fixed_abs, tag = 'smem constant byte address 0x4 - core index']
  #allocation1 [shape = 'u32[72,128]{1,0:T(1,128)}', space=vmem, size = 0x9000, scoped, tag = 'internal scratch']
  #allocation2 [shape = 'f32[128,128]{1,0:T(8,128)}', space=vmem, size = 0x10000, scoped, tag = 'scratch operand']
  #allocation3 [shape = 'f32[8,128]{1,0:T(8,128)}', space=vmem, size = 0x1000, scoped, tag = 'scratch operand']
  %s0 = inlined_call_operand.vmem [shape: bf16[128,128], index: 0, kind: input, shape index: {}]
  %s1 = inlined_call_operand.vmem [shape: bf16[128,128], index: 1, kind: input, shape index: {}]
  %s2 = inlined_call_operand.vmem [shape: bf16[128,128], index: 2, kind: input, shape index: {}]
  %s3 = inlined_call_operand.vmem [shape: f32[1,128], index: 3, kind: input, shape index: {}]
  %s4 = inlined_call_operand.vmem [shape: bf16[8,128], index: 4, kind: input, shape index: {}]
  %s5 = inlined_call_operand.vmem [shape: bf16[128,128], index: 5, kind: input, shape index: {}]
  %s6 = inlined_call_operand.vmem [shape: f32[1,128], index: 6, kind: input, shape index: {}]
  %s7 = inlined_call_operand.vmem [shape: f32[8,128], index: 7, kind: output, shape index: {}]
  %s8 = sld [smem:[#allocation0]]
  $region54: #{gcn_forward.5} parent=0
    _
  %s10 = ssub.s32 1, %s8
  %s11 = scalar_select 0, %s10, %s8
  // Predicated region
  $region2: #{gcn_forward.5} parent=0 // pred_check
    _
  $region3: #{gcn_forward.5} parent=0 // pred_check_branch
    %13 = sbr.rel (0) target = $region5
  $region4: #{gcn_forward.5} parent=0 // pred_region
    _
  $region5: #{gcn_forward.5} parent=0 // pred_fallthru
    _
  // Predicated region
  $region6: #{gcn_forward.5} parent=0 // pred_check
    _
  $region7: #{gcn_forward.5} parent=0 // pred_check_branch
    %15 = sbr.rel (0) target = $region9
  $region8: #{gcn_forward.5} parent=0 // pred_region
    _
  $region9: #{gcn_forward.5} parent=0 // pred_fallthru
    _
  // Predicated region
  $region10: #{gcn_forward.5} parent=0 // pred_check
    _
  $region11: #{gcn_forward.5} parent=0 // pred_check_branch
    %17 = sbr.rel (0) target = $region13
  $region12: #{gcn_forward.5} parent=0 // pred_region
    _
  $region13: #{gcn_forward.5} parent=0 // pred_fallthru
    _
  // Predicated region
  $region14: #{gcn_forward.5} parent=0 // pred_check
    _
  $region15: #{gcn_forward.5} parent=0 // pred_check_branch
    %19 = sbr.rel (0) target = $region17
  $region16: #{gcn_forward.5} parent=0 // pred_region
    _
  $region17: #{gcn_forward.5} parent=0 // pred_fallthru
    _
  // Predicated region
  $region18: #{gcn_forward.5} parent=0 // pred_check
    _
  $region19: #{gcn_forward.5} parent=0 // pred_check_branch
    %21 = sbr.rel (0) target = $region21
  $region20: #{gcn_forward.5} parent=0 // pred_region
    _
  $region21: #{gcn_forward.5} parent=0 // pred_fallthru
    _
  // Predicated region
  $region22: #{gcn_forward.5} parent=0 // pred_check
    _
  $region23: #{gcn_forward.5} parent=0 // pred_check_branch
    %23 = sbr.rel (0) target = $region25
  $region24: #{gcn_forward.5} parent=0 // pred_region
    _
  $region25: #{gcn_forward.5} parent=0 // pred_fallthru
    _
  // Predicated region
  $region26: #{gcn_forward.5} parent=0 // pred_check
    _
  $region27: #{gcn_forward.5} parent=0 // pred_check_branch
    %25 = sbr.rel (0) target = $region29
  $region28: #{gcn_forward.5} parent=0 // pred_region
    _
  $region29: #{gcn_forward.5} parent=0 // pred_fallthru
    _
  %p26 = scmp.eq.s32.totalorder 0, 0
  %p27 = scmp.eq.s32.totalorder 0, 0
  %p28 = pnand %p26, %p27
  %p29 = pneg %p28
  // Predicated region
  $region30: #{gcn_forward.5} parent=0 // pred_check
    _
  $region31: #{gcn_forward.5} parent=0 // pred_check_branch
    %31 = sbr.rel (%p28) target = $region33
  $region32: #{gcn_forward.5} parent=0 // pred_region
    %32 = vst [vmem:[#allocation3] sm:$0xff] 0.0
  $region33: #{gcn_forward.5} parent=0 // pred_fallthru
    _
  // Predicated region
  $region34: #{gcn_forward.5} parent=0 // pred_check
    %p33 = pneg %p27
  $region35: #{gcn_forward.5} parent=0 // pred_check_branch
    %35 = sbr.rel (%p33) target = $region37
  $region36: #{gcn_forward.5} parent=0 // pred_region
    %36 = vst [vmem:[#allocation2] sm:$0xff] 0.0
    %37 = vst [vmem:[#allocation2 + $0x8] sm:$0xff] 0.0
    %38 = vst [vmem:[#allocation2 + $0x10] sm:$0xff] 0.0
    %39 = vst [vmem:[#allocation2 + $0x18] sm:$0xff] 0.0
    %40 = vst [vmem:[#allocation2 + $0x20] sm:$0xff] 0.0
    %41 = vst [vmem:[#allocation2 + $0x28] sm:$0xff] 0.0
    %42 = vst [vmem:[#allocation2 + $0x30] sm:$0xff] 0.0
    %43 = vst [vmem:[#allocation2 + $0x38] sm:$0xff] 0.0
    %44 = vst [vmem:[#allocation2 + $0x40] sm:$0xff] 0.0
    %45 = vst [vmem:[#allocation2 + $0x48] sm:$0xff] 0.0
    %46 = vst [vmem:[#allocation2 + $0x50] sm:$0xff] 0.0
    %47 = vst [vmem:[#allocation2 + $0x58] sm:$0xff] 0.0
    %48 = vst [vmem:[#allocation2 + $0x60] sm:$0xff] 0.0
    %49 = vst [vmem:[#allocation2 + $0x68] sm:$0xff] 0.0
    %50 = vst [vmem:[#allocation2 + $0x70] sm:$0xff] 0.0
    %51 = vst [vmem:[#allocation2 + $0x78] sm:$0xff] 0.0
  $region37: #{gcn_forward.5} parent=0 // pred_fallthru
    _
  %v52 = vld [vmem:[%s1] sm:$0xf]
  %v53 = vld [vmem:[%s1 + $0x4] sm:$0xf]
  %v54 = vld [vmem:[%s1 + $0x8] sm:$0xf]
  %v55 = vld [vmem:[%s1 + $0xc] sm:$0xf]
  %v56 = vld [vmem:[%s1 + $0x10] sm:$0xf]
  %v57 = vld [vmem:[%s1 + $0x14] sm:$0xf]
  %v58 = vld [vmem:[%s1 + $0x18] sm:$0xf]
  %v59 = vld [vmem:[%s1 + $0x1c] sm:$0xf]
  %v60 = vld [vmem:[%s1 + $0x20] sm:$0xf]
  %v61 = vld [vmem:[%s1 + $0x24] sm:$0xf]
  %v62 = vld [vmem:[%s1 + $0x28] sm:$0xf]
  %v63 = vld [vmem:[%s1 + $0x2c] sm:$0xf]
  %v64 = vld [vmem:[%s1 + $0x30] sm:$0xf]
  %v65 = vld [vmem:[%s1 + $0x34] sm:$0xf]
  %v66 = vld [vmem:[%s1 + $0x38] sm:$0xf]
  %v67 = vld [vmem:[%s1 + $0x3c] sm:$0xf]
  %v68 = vld [vmem:[%s2] sm:$0xf]
  %v69 = vld [vmem:[%s2 + $0x4] sm:$0xf]
  %v70 = vld [vmem:[%s2 + $0x8] sm:$0xf]
  %v71 = vld [vmem:[%s2 + $0xc] sm:$0xf]
  %v72 = vld [vmem:[%s2 + $0x10] sm:$0xf]
  %v73 = vld [vmem:[%s2 + $0x14] sm:$0xf]
  %v74 = vld [vmem:[%s2 + $0x18] sm:$0xf]
  %v75 = vld [vmem:[%s2 + $0x1c] sm:$0xf]
  %v76 = vld [vmem:[%s2 + $0x20] sm:$0xf]
  %v77 = vld [vmem:[%s2 + $0x24] sm:$0xf]
  %v78 = vld [vmem:[%s2 + $0x28] sm:$0xf]
  %v79 = vld [vmem:[%s2 + $0x2c] sm:$0xf]
  %v80 = vld [vmem:[%s2 + $0x30] sm:$0xf]
  %v81 = vld [vmem:[%s2 + $0x34] sm:$0xf]
  %v82 = vld [vmem:[%s2 + $0x38] sm:$0xf]
  %v83 = vld [vmem:[%s2 + $0x3c] sm:$0xf]
  %v100 = vunpack.c.l.b16 %v52
  %v101 = vunpack.c.l.b16 %v53
  %v102 = vunpack.c.l.b16 %v54
  %v103 = vunpack.c.l.b16 %v55
  %v104 = vunpack.c.l.b16 %v56
  %v105 = vunpack.c.l.b16 %v57
  %v106 = vunpack.c.l.b16 %v58
  %v107 = vunpack.c.l.b16 %v59
  %v108 = vunpack.c.l.b16 %v60
  %v109 = vunpack.c.l.b16 %v61
  %v110 = vunpack.c.l.b16 %v62
  %v111 = vunpack.c.l.b16 %v63
  %v112 = vunpack.c.l.b16 %v64
  %v113 = vunpack.c.l.b16 %v65
  %v114 = vunpack.c.l.b16 %v66
  %v115 = vunpack.c.l.b16 %v67
  %v116 = vpack.c.b16 %v101, %v100
  %v117 = vpack.c.b16 %v103, %v102
  %v118 = vpack.c.b16 %v105, %v104
  %v119 = vpack.c.b16 %v107, %v106
  %v120 = vpack.c.b16 %v109, %v108
  %v121 = vpack.c.b16 %v111, %v110
  %v122 = vpack.c.b16 %v113, %v112
  %v123 = vpack.c.b16 %v115, %v114
  %v148 = vunpack.c.l.b16 %v68
  %v149 = vunpack.c.l.b16 %v69
  %v150 = vunpack.c.l.b16 %v70
  %v151 = vunpack.c.l.b16 %v71
  %v152 = vunpack.c.l.b16 %v72
  %v153 = vunpack.c.l.b16 %v73
  %v154 = vunpack.c.l.b16 %v74
  %v155 = vunpack.c.l.b16 %v75
  %v156 = vunpack.c.l.b16 %v76
  %v157 = vunpack.c.l.b16 %v77
  %v158 = vunpack.c.l.b16 %v78
  %v159 = vunpack.c.l.b16 %v79
  %v160 = vunpack.c.l.b16 %v80
  %v161 = vunpack.c.l.b16 %v81
  %v162 = vunpack.c.l.b16 %v82
  %v163 = vunpack.c.l.b16 %v83
  %v164 = vpack.c.b16 %v149, %v148
  %v165 = vpack.c.b16 %v151, %v150
  %v166 = vpack.c.b16 %v153, %v152
  %v167 = vpack.c.b16 %v155, %v154
  %v168 = vpack.c.b16 %v157, %v156
  %v169 = vpack.c.b16 %v159, %v158
  %v170 = vpack.c.b16 %v161, %v160
  %v171 = vpack.c.b16 %v163, %v162
  %180 = vmatpush.bf16.msra.mxu0 %v171
  %181 = vmatpush.bf16.msra.mxu0 %v170
  %182 = vmatpush.bf16.msra.mxu0 %v169
  %183 = vmatpush.bf16.msra.mxu0 %v168
  %184 = vmatpush.bf16.msra.mxu0 %v167
  %185 = vmatpush.bf16.msra.mxu0 %v166
  %186 = vmatpush.bf16.msra.mxu0 %v165
  %187 = vmatpush.bf16.msra.mxu0 %v164
  %188 = vmatmul.bf16.gmra.mxu0 %v116
  %v189 = vpop.f32.mrf.mxu0
  %v190 = vadd.f32 0.0, %v189
  %v191 = vpop.f32.mrf.mxu0
  %v192 = vadd.f32 0.0, %v191
  %193 = vmatmul.bf16.gmra.mxu0 %v117
  %v194 = vpop.f32.mrf.mxu0
  %v195 = vadd.f32 0.0, %v194
  %v196 = vpop.f32.mrf.mxu0
  %v197 = vadd.f32 0.0, %v196
  %198 = vmatmul.bf16.gmra.mxu0 %v118
  %v199 = vpop.f32.mrf.mxu0
  %v200 = vadd.f32 0.0, %v199
  %v201 = vpop.f32.mrf.mxu0
  %v202 = vadd.f32 0.0, %v201
  %203 = vmatmul.bf16.gmra.mxu0 %v119
  %v204 = vpop.f32.mrf.mxu0
  %v205 = vadd.f32 0.0, %v204
  %v206 = vpop.f32.mrf.mxu0
  %v207 = vadd.f32 0.0, %v206
  %208 = vmatmul.bf16.gmra.mxu0 %v120
  %v209 = vpop.f32.mrf.mxu0
  %v210 = vadd.f32 0.0, %v209
  %v211 = vpop.f32.mrf.mxu0
  %v212 = vadd.f32 0.0, %v211
  %213 = vmatmul.bf16.gmra.mxu0 %v121
  %v214 = vpop.f32.mrf.mxu0
  %v215 = vadd.f32 0.0, %v214
  %v216 = vpop.f32.mrf.mxu0
  %v217 = vadd.f32 0.0, %v216
  %218 = vmatmul.bf16.gmra.mxu0 %v122
  %v219 = vpop.f32.mrf.mxu0
  %v220 = vadd.f32 0.0, %v219
  %v221 = vpop.f32.mrf.mxu0
  %v222 = vadd.f32 0.0, %v221
  %223 = vmatmul.bf16.gmra.mxu0 %v123
  %v224 = vpop.f32.mrf.mxu0
  %v225 = vadd.f32 0.0, %v224
  %v226 = vpop.f32.mrf.mxu0
  %v227 = vadd.f32 0.0, %v226
  %228 = vdwg.mxu0
  %v229 = vpack.c.bf16 %v192, %v190
  %v230 = vpack.c.bf16 %v197, %v195
  %v231 = vpack.c.bf16 %v202, %v200
  %v232 = vpack.c.bf16 %v207, %v205
  %v233 = vpack.c.bf16 %v212, %v210
  %v234 = vpack.c.bf16 %v217, %v215
  %v235 = vpack.c.bf16 %v222, %v220
  %v236 = vpack.c.bf16 %v227, %v225
  %v237 = vld [vmem:[#allocation2] sm:$0xff]
  %v238 = vld [vmem:[#allocation2 + $0x8] sm:$0xff]
  %v239 = vld [vmem:[#allocation2 + $0x10] sm:$0xff]
  %v240 = vld [vmem:[#allocation2 + $0x18] sm:$0xff]
  %v241 = vld [vmem:[#allocation2 + $0x20] sm:$0xff]
  %v242 = vld [vmem:[#allocation2 + $0x28] sm:$0xff]
  %v243 = vld [vmem:[#allocation2 + $0x30] sm:$0xff]
  %v244 = vld [vmem:[#allocation2 + $0x38] sm:$0xff]
  %v245 = vld [vmem:[#allocation2 + $0x40] sm:$0xff]
  %v246 = vld [vmem:[#allocation2 + $0x48] sm:$0xff]
  %v247 = vld [vmem:[#allocation2 + $0x50] sm:$0xff]
  %v248 = vld [vmem:[#allocation2 + $0x58] sm:$0xff]
  %v249 = vld [vmem:[#allocation2 + $0x60] sm:$0xff]
  %v250 = vld [vmem:[#allocation2 + $0x68] sm:$0xff]
  %v251 = vld [vmem:[#allocation2 + $0x70] sm:$0xff]
  %v252 = vld [vmem:[#allocation2 + $0x78] sm:$0xff]
  %v253 = vld [vmem:[%s0] sm:$0xf]
  %v254 = vld [vmem:[%s0 + $0x4] sm:$0xf]
  %v255 = vld [vmem:[%s0 + $0x8] sm:$0xf]
  %v256 = vld [vmem:[%s0 + $0xc] sm:$0xf]
  %v257 = vld [vmem:[%s0 + $0x10] sm:$0xf]
  %v258 = vld [vmem:[%s0 + $0x14] sm:$0xf]
  %v259 = vld [vmem:[%s0 + $0x18] sm:$0xf]
  %v260 = vld [vmem:[%s0 + $0x1c] sm:$0xf]
  %v261 = vld [vmem:[%s0 + $0x20] sm:$0xf]
  %v262 = vld [vmem:[%s0 + $0x24] sm:$0xf]
  %v263 = vld [vmem:[%s0 + $0x28] sm:$0xf]
  %v264 = vld [vmem:[%s0 + $0x2c] sm:$0xf]
  %v265 = vld [vmem:[%s0 + $0x30] sm:$0xf]
  %v266 = vld [vmem:[%s0 + $0x34] sm:$0xf]
  %v267 = vld [vmem:[%s0 + $0x38] sm:$0xf]
  %v268 = vld [vmem:[%s0 + $0x3c] sm:$0xf]
  %v285 = vunpack.c.l.b16 %v253
  %v286 = vunpack.c.l.b16 %v254
  %v287 = vunpack.c.l.b16 %v255
  %v288 = vunpack.c.l.b16 %v256
  %v289 = vunpack.c.l.b16 %v257
  %v290 = vunpack.c.l.b16 %v258
  %v291 = vunpack.c.l.b16 %v259
  %v292 = vunpack.c.l.b16 %v260
  %v293 = vunpack.c.l.b16 %v261
  %v294 = vunpack.c.l.b16 %v262
  %v295 = vunpack.c.l.b16 %v263
  %v296 = vunpack.c.l.b16 %v264
  %v297 = vunpack.c.l.b16 %v265
  %v298 = vunpack.c.l.b16 %v266
  %v299 = vunpack.c.l.b16 %v267
  %v300 = vunpack.c.l.b16 %v268
  %v301 = vpack.c.b16 %v286, %v285
  %v302 = vpack.c.b16 %v288, %v287
  %v303 = vpack.c.b16 %v290, %v289
  %v304 = vpack.c.b16 %v292, %v291
  %v305 = vpack.c.b16 %v294, %v293
  %v306 = vpack.c.b16 %v296, %v295
  %v307 = vpack.c.b16 %v298, %v297
  %v308 = vpack.c.b16 %v300, %v299
  %317 = vmatpush.bf16.msra.mxu0 %v236
  %318 = vmatpush.bf16.msra.mxu0 %v235
  %319 = vmatpush.bf16.msra.mxu0 %v234
  %320 = vmatpush.bf16.msra.mxu0 %v233
  %321 = vmatpush.bf16.msra.mxu0 %v232
  %322 = vmatpush.bf16.msra.mxu0 %v231
  %323 = vmatpush.bf16.msra.mxu0 %v230
  %324 = vmatpush.bf16.msra.mxu0 %v229
  %325 = vmatmul.bf16.gmra.mxu0 %v301
  %v326 = vpop.f32.mrf.mxu0
  %v327 = vadd.f32 0.0, %v326
  %v328 = vpop.f32.mrf.mxu0
  %v329 = vadd.f32 0.0, %v328
  %330 = vmatmul.bf16.gmra.mxu0 %v302
  %v331 = vpop.f32.mrf.mxu0
  %v332 = vadd.f32 0.0, %v331
  %v333 = vpop.f32.mrf.mxu0
  %v334 = vadd.f32 0.0, %v333
  %335 = vmatmul.bf16.gmra.mxu0 %v303
  %v336 = vpop.f32.mrf.mxu0
  %v337 = vadd.f32 0.0, %v336
  %v338 = vpop.f32.mrf.mxu0
  %v339 = vadd.f32 0.0, %v338
  %340 = vmatmul.bf16.gmra.mxu0 %v304
  %v341 = vpop.f32.mrf.mxu0
  %v342 = vadd.f32 0.0, %v341
  %v343 = vpop.f32.mrf.mxu0
  %v344 = vadd.f32 0.0, %v343
  %345 = vmatmul.bf16.gmra.mxu0 %v305
  %v346 = vpop.f32.mrf.mxu0
  %v347 = vadd.f32 0.0, %v346
  %v348 = vpop.f32.mrf.mxu0
  %v349 = vadd.f32 0.0, %v348
  %350 = vmatmul.bf16.gmra.mxu0 %v306
  %v351 = vpop.f32.mrf.mxu0
  %v352 = vadd.f32 0.0, %v351
  %v353 = vpop.f32.mrf.mxu0
  %v354 = vadd.f32 0.0, %v353
  %355 = vmatmul.bf16.gmra.mxu0 %v307
  %v356 = vpop.f32.mrf.mxu0
  %v357 = vadd.f32 0.0, %v356
  %v358 = vpop.f32.mrf.mxu0
  %v359 = vadd.f32 0.0, %v358
  %360 = vmatmul.bf16.gmra.mxu0 %v308
  %v361 = vpop.f32.mrf.mxu0
  %v362 = vadd.f32 0.0, %v361
  %v363 = vpop.f32.mrf.mxu0
  %v364 = vadd.f32 0.0, %v363
  %365 = vdwg.mxu0
  %v366 = vadd.f32 %v237, %v327
  %v367 = vadd.f32 %v238, %v329
  %v368 = vadd.f32 %v239, %v332
  %v369 = vadd.f32 %v240, %v334
  %v370 = vadd.f32 %v241, %v337
  %v371 = vadd.f32 %v242, %v339
  %v372 = vadd.f32 %v243, %v342
  %v373 = vadd.f32 %v244, %v344
  %v374 = vadd.f32 %v245, %v347
  %v375 = vadd.f32 %v246, %v349
  %v376 = vadd.f32 %v247, %v352
  %v377 = vadd.f32 %v248, %v354
  %v378 = vadd.f32 %v249, %v357
  %v379 = vadd.f32 %v250, %v359
  %v380 = vadd.f32 %v251, %v362
  %v381 = vadd.f32 %v252, %v364
  %382 = vst [vmem:[#allocation2] sm:$0xff] %v366
  %383 = vst [vmem:[#allocation2 + $0x8] sm:$0xff] %v367
  %384 = vst [vmem:[#allocation2 + $0x10] sm:$0xff] %v368
  %385 = vst [vmem:[#allocation2 + $0x18] sm:$0xff] %v369
  %386 = vst [vmem:[#allocation2 + $0x20] sm:$0xff] %v370
  %387 = vst [vmem:[#allocation2 + $0x28] sm:$0xff] %v371
  %388 = vst [vmem:[#allocation2 + $0x30] sm:$0xff] %v372
  %389 = vst [vmem:[#allocation2 + $0x38] sm:$0xff] %v373
  %390 = vst [vmem:[#allocation2 + $0x40] sm:$0xff] %v374
  %391 = vst [vmem:[#allocation2 + $0x48] sm:$0xff] %v375
  %392 = vst [vmem:[#allocation2 + $0x50] sm:$0xff] %v376
  %393 = vst [vmem:[#allocation2 + $0x58] sm:$0xff] %v377
  %394 = vst [vmem:[#allocation2 + $0x60] sm:$0xff] %v378
  %395 = vst [vmem:[#allocation2 + $0x68] sm:$0xff] %v379
  %396 = vst [vmem:[#allocation2 + $0x70] sm:$0xff] %v380
  %397 = vst [vmem:[#allocation2 + $0x78] sm:$0xff] %v381
  // Predicated region
  $region38: #{gcn_forward.5} parent=0 // pred_check
    %p398 = pneg %p27
  $region39: #{gcn_forward.5} parent=0 // pred_check_branch
    %400 = sbr.rel (%p398) target = $region41
  $region40: #{gcn_forward.5} parent=0 // pred_region
    %v401 = vld [vmem:[#allocation2] sm:$0xff]
    %v402 = vld [vmem:[#allocation2 + $0x8] sm:$0xff]
    %v403 = vld [vmem:[#allocation2 + $0x10] sm:$0xff]
    %v404 = vld [vmem:[#allocation2 + $0x18] sm:$0xff]
    %v405 = vld [vmem:[#allocation2 + $0x20] sm:$0xff]
    %v406 = vld [vmem:[#allocation2 + $0x28] sm:$0xff]
    %v407 = vld [vmem:[#allocation2 + $0x30] sm:$0xff]
    %v408 = vld [vmem:[#allocation2 + $0x38] sm:$0xff]
    %v409 = vld [vmem:[#allocation2 + $0x40] sm:$0xff]
    %v410 = vld [vmem:[#allocation2 + $0x48] sm:$0xff]
    %v411 = vld [vmem:[#allocation2 + $0x50] sm:$0xff]
    %v412 = vld [vmem:[#allocation2 + $0x58] sm:$0xff]
    %v413 = vld [vmem:[#allocation2 + $0x60] sm:$0xff]
    %v414 = vld [vmem:[#allocation2 + $0x68] sm:$0xff]
    %v415 = vld [vmem:[#allocation2 + $0x70] sm:$0xff]
    %v416 = vld [vmem:[#allocation2 + $0x78] sm:$0xff]
    %v417 = vld [vmem:[%s3] sm:$0x1]
    %v419 = vperm.slane %v417, 0
    %v421 = vadd.f32 %v401, %v419
    %v422 = vadd.f32 %v402, %v419
    %v423 = vadd.f32 %v403, %v419
    %v424 = vadd.f32 %v404, %v419
    %v425 = vadd.f32 %v405, %v419
    %v426 = vadd.f32 %v406, %v419
    %v427 = vadd.f32 %v407, %v419
    %v428 = vadd.f32 %v408, %v419
    %v429 = vadd.f32 %v409, %v419
    %v430 = vadd.f32 %v410, %v419
    %v431 = vadd.f32 %v411, %v419
    %v432 = vadd.f32 %v412, %v419
    %v433 = vadd.f32 %v413, %v419
    %v434 = vadd.f32 %v414, %v419
    %v435 = vadd.f32 %v415, %v419
    %v436 = vadd.f32 %v416, %v419
    %v437 = vpack.c.bf16 %v422, %v421
    %v438 = vpack.c.bf16 %v424, %v423
    %v439 = vpack.c.bf16 %v426, %v425
    %v440 = vpack.c.bf16 %v428, %v427
    %v441 = vpack.c.bf16 %v430, %v429
    %v442 = vpack.c.bf16 %v432, %v431
    %v443 = vpack.c.bf16 %v434, %v433
    %v444 = vpack.c.bf16 %v436, %v435
    %v445 = vld [vmem:[#allocation3] sm:$0xff]
    %v446 = vld [vmem:[%s4] sm:$0xf]
    %447 = vmatpush.bf16.msra.mxu0 %v444
    %448 = vmatpush.bf16.msra.mxu0 %v443
    %449 = vmatpush.bf16.msra.mxu0 %v442
    %450 = vmatpush.bf16.msra.mxu0 %v441
    %451 = vmatpush.bf16.msra.mxu0 %v440
    %452 = vmatpush.bf16.msra.mxu0 %v439
    %453 = vmatpush.bf16.msra.mxu0 %v438
    %454 = vmatpush.bf16.msra.mxu0 %v437
    %455 = vmatmul.bf16.gmra.mxu0 %v446
    %v456 = vpop.f32.mrf.mxu0
    %v457 = vadd.f32 0.0, %v456
    %v458 = vpop.f32.mrf.mxu0
    %459 = vdwg.mxu0
    %v460 = vadd.f32 %v445, %v457
    %461 = vst [vmem:[#allocation3] sm:$0xff] %v460
  $region41: #{gcn_forward.5} parent=0 // pred_fallthru
    _
  // Predicated region
  $region42: #{gcn_forward.5} parent=0 // pred_check
    _
  $region43: #{gcn_forward.5} parent=0 // pred_check_branch
    %463 = sbr.rel (%p28) target = $region45
  $region44: #{gcn_forward.5} parent=0 // pred_region
    %v464 = vld [vmem:[#allocation3] sm:$0xff]
    %v465 = vpack.c.bf16 %v464, %v464
    %v466 = vld [vmem:[%s5] sm:$0xf]
    %v467 = vld [vmem:[%s5 + $0x4] sm:$0xf]
    %v468 = vld [vmem:[%s5 + $0x8] sm:$0xf]
    %v469 = vld [vmem:[%s5 + $0xc] sm:$0xf]
    %v470 = vld [vmem:[%s5 + $0x10] sm:$0xf]
    %v471 = vld [vmem:[%s5 + $0x14] sm:$0xf]
    %v472 = vld [vmem:[%s5 + $0x18] sm:$0xf]
    %v473 = vld [vmem:[%s5 + $0x1c] sm:$0xf]
    %v474 = vld [vmem:[%s5 + $0x20] sm:$0xf]
    %v475 = vld [vmem:[%s5 + $0x24] sm:$0xf]
    %v476 = vld [vmem:[%s5 + $0x28] sm:$0xf]
    %v477 = vld [vmem:[%s5 + $0x2c] sm:$0xf]
    %v478 = vld [vmem:[%s5 + $0x30] sm:$0xf]
    %v479 = vld [vmem:[%s5 + $0x34] sm:$0xf]
    %v480 = vld [vmem:[%s5 + $0x38] sm:$0xf]
    %v481 = vld [vmem:[%s5 + $0x3c] sm:$0xf]
    %v482 = vld [vmem:[%s6] sm:$0x1]
    %v484 = vperm.slane %v482, 0
    %v502 = vunpack.c.l.b16 %v466
    %v503 = vunpack.c.l.b16 %v467
    %v504 = vunpack.c.l.b16 %v468
    %v505 = vunpack.c.l.b16 %v469
    %v506 = vunpack.c.l.b16 %v470
    %v507 = vunpack.c.l.b16 %v471
    %v508 = vunpack.c.l.b16 %v472
    %v509 = vunpack.c.l.b16 %v473
    %v510 = vunpack.c.l.b16 %v474
    %v511 = vunpack.c.l.b16 %v475
    %v512 = vunpack.c.l.b16 %v476
    %v513 = vunpack.c.l.b16 %v477
    %v514 = vunpack.c.l.b16 %v478
    %v515 = vunpack.c.l.b16 %v479
    %v516 = vunpack.c.l.b16 %v480
    %v517 = vunpack.c.l.b16 %v481
    %v518 = vpack.c.b16 %v503, %v502
    %v519 = vpack.c.b16 %v505, %v504
    %v520 = vpack.c.b16 %v507, %v506
    %v521 = vpack.c.b16 %v509, %v508
    %v522 = vpack.c.b16 %v511, %v510
    %v523 = vpack.c.b16 %v513, %v512
    %v524 = vpack.c.b16 %v515, %v514
    %v525 = vpack.c.b16 %v517, %v516
    %534 = vmatpush.bf16.msra.mxu0 %v525
    %535 = vmatpush.bf16.msra.mxu0 %v524
    %536 = vmatpush.bf16.msra.mxu0 %v523
    %537 = vmatpush.bf16.msra.mxu0 %v522
    %538 = vmatpush.bf16.msra.mxu0 %v521
    %539 = vmatpush.bf16.msra.mxu0 %v520
    %540 = vmatpush.bf16.msra.mxu0 %v519
    %541 = vmatpush.bf16.msra.mxu0 %v518
    %542 = vmatmul.bf16.gmra.mxu0 %v465
    %v543 = vpop.f32.mrf.mxu0
    %v544 = vadd.f32 %v484, %v543
    %v545 = vpop.f32.mrf.mxu0
    %546 = vdwg.mxu0
    %547 = vst [vmem:[%s7] sm:$0xff] %v544
  $region45: #{gcn_forward.5} parent=0 // pred_fallthru
    _
  // Predicated region
  $region46: #{gcn_forward.5} parent=0 // pred_check
    _
  $region47: #{gcn_forward.5} parent=0 // pred_check_branch
    %549 = sbr.rel (0) target = $region49
  $region48: #{gcn_forward.5} parent=0 // pred_region
    _
  $region49: #{gcn_forward.5} parent=0 // pred_fallthru
    _
  // Predicated region
  $region50: #{gcn_forward.5} parent=0 // pred_check
    _
  $region51: #{gcn_forward.5} parent=0 // pred_check_branch
    %551 = sbr.rel (0) target = $region53
  $region52: #{gcn_forward.5} parent=0 // pred_region
    _
  $region53: #{gcn_forward.5} parent=0 // pred_fallthru
    _

</llo_original>
